<compile_context>
chip_gen: v6e
topology: v6e:2x2x1
jax: 0.10.0
libtpu: 0.0.40
codegen_flags: <defaults>
</compile_context>

<pallas_src>
import math
from functools import partial

import jax
import jax.numpy as jnp
from jax.experimental import pallas as pl
from jax.experimental.pallas import tpu as pltpu


# ------------------------- fused GEMM + epilogue kernel -------------------------

def _fused_mm_kernel(*refs, has_scale, has_shift, has_res, relu):
    """out = epilogue(A @ B); A:(TM,TK) bf16, B:(TK,TN) bf16, acc f32.

    Epilogue (static flags): acc*scale + shift (+ residual) (+ ReLU), f32."""
    i = 0
    a_ref = refs[i]; i += 1
    b_ref = refs[i]; i += 1
    s_ref = t_ref = r_ref = None
    if has_scale:
        s_ref = refs[i]; i += 1
    if has_shift:
        t_ref = refs[i]; i += 1
    if has_res:
        r_ref = refs[i]; i += 1
    o_ref = refs[i]; i += 1
    acc_ref = refs[i]

    @pl.when(pl.program_id(2) == 0)
    def _():
        acc_ref[...] = jnp.zeros_like(acc_ref)

    acc_ref[...] += jnp.dot(a_ref[...], b_ref[...],
                            preferred_element_type=jnp.float32)

    @pl.when(pl.program_id(2) == pl.num_programs(2) - 1)
    def _():
        acc = acc_ref[...]
        if has_scale:
            acc = acc * s_ref[...]
        if has_shift:
            acc = acc + t_ref[...]
        if has_res:
            acc = acc + r_ref[...].astype(jnp.float32)
        if relu:
            acc = jnp.maximum(acc, 0.0)
        o_ref[...] = acc.astype(o_ref.dtype)


def _pick_tk(K):
    """K tile: full K when small, else a 128-multiple that divides K."""
    if K <= 1024:
        return K
    for cand in (512, 768, 384, 256, 1152, 128):
        if K % cand == 0:
            return cand
    return K  # fallback: whole K resident


def _fused_matmul(a, b, *, scale=None, shift=None, residual=None,
                  relu=False, out_dtype=jnp.bfloat16):
    """(M,K) @ (K,N) with fused per-channel affine / residual / ReLU epilogue."""
    M, K = a.shape
    Kb, N = b.shape
    assert K == Kb, (a.shape, b.shape)

    a = a.astype(jnp.bfloat16)   # MXU runs bf16 inputs, f32 accumulation
    b = b.astype(jnp.bfloat16)

    TM = M if M <= 256 else 256
    TN = N if N <= 256 else 256
    TK = _pick_tk(K)
    grid = (pl.cdiv(M, TM), pl.cdiv(N, TN), pl.cdiv(K, TK))

    in_specs = [pl.BlockSpec((TM, TK), lambda i, j, k: (i, k)),
                pl.BlockSpec((TK, TN), lambda i, j, k: (k, j))]
    inputs = [a, b]
    if scale is not None:
        in_specs.append(pl.BlockSpec((1, TN), lambda i, j, k: (0, j)))
        inputs.append(scale.astype(jnp.float32))
    if shift is not None:
        in_specs.append(pl.BlockSpec((1, TN), lambda i, j, k: (0, j)))
        inputs.append(shift.astype(jnp.float32))
    if residual is not None:
        in_specs.append(pl.BlockSpec((TM, TN), lambda i, j, k: (i, j)))
        inputs.append(residual)

    kernel = partial(_fused_mm_kernel,
                     has_scale=scale is not None,
                     has_shift=shift is not None,
                     has_res=residual is not None,
                     relu=relu)

    return pl.pallas_call(
        kernel,
        out_shape=jax.ShapeDtypeStruct((M, N), out_dtype),
        grid=grid,
        in_specs=in_specs,
        out_specs=pl.BlockSpec((TM, TN), lambda i, j, k: (i, j)),
        scratch_shapes=[pltpu.VMEM((TM, TN), jnp.float32)],
        compiler_params=pltpu.CompilerParams(
            dimension_semantics=("parallel", "parallel", "arbitrary")),
    )(*inputs)


# ------------------------------ op-level wrappers ------------------------------

@partial(jax.jit, static_argnames=("stride", "pad", "relu", "out_dtype"))
def conv2d_bn(x, w, scale=None, shift=None, residual=None, *,
              stride, pad, relu=False, out_dtype=jnp.bfloat16):
    """NHWC conv (HWIO weight, no bias) == nn.Conv2d, with the folded eval-mode
    BatchNorm / residual add / ReLU fused into the matmul epilogue.
    1x1 convs feed the GEMM via a free reshape; KxK convs use im2col."""
    N, H, W, Cin = x.shape
    KH, KW, _, Cout = w.shape
    OH = (H + 2 * pad - KH) // stride + 1
    OW = (W + 2 * pad - KW) // stride + 1

    if KH == 1 and KW == 1 and pad == 0:
        xs = x if stride == 1 else x[:, ::stride, ::stride, :]
        a = xs.reshape(N * OH * OW, Cin)
        b = w.reshape(Cin, Cout)
    else:
        # TODO(synk): an implicit-GEMM kernel (in-kernel kh/kw accumulation over
        # a halo block) would avoid this KH*KW-fold im2col materialization;
        # left as XLA-fused slicing+concat (only conv1 7x7 and the 3x3 convs).
        xp = jnp.pad(x, ((0, 0), (pad, pad), (pad, pad), (0, 0)))
        cols = [xp[:, kh:kh + stride * OH:stride, kw:kw + stride * OW:stride, :]
                for kh in range(KH) for kw in range(KW)]
        K = KH * KW * Cin
        Kp = ((K + 15) // 16) * 16           # sublane-friendly K (conv1: 147->160)
        if Kp != K:
            cols.append(jnp.zeros((N, OH, OW, Kp - K), x.dtype))
        a = jnp.concatenate(cols, axis=-1).reshape(N * OH * OW, Kp)
        b = w.reshape(K, Cout)
        if Kp != K:
            b = jnp.pad(b, ((0, Kp - K), (0, 0)))

    if residual is not None:
        residual = residual.reshape(N * OH * OW, Cout)

    out = _fused_matmul(a, b, scale=scale, shift=shift, residual=residual,
                        relu=relu, out_dtype=out_dtype)
    return out.reshape(N, OH, OW, Cout)


@jax.jit
def maxpool_3x3_s2(x):
    """nn.MaxPool2d(kernel_size=3, stride=2, padding=1) on NHWC.
    XLA-fused 9-way maximum tree over shifted strided views (per perf review)
    instead of materializing a 9x stacked copy for a Pallas max kernel."""
    N, H, W, C = x.shape
    k, s, pad = 3, 2, 1
    OH = (H + 2 * pad - k) // s + 1
    OW = (W + 2 * pad - k) // s + 1
    xp = jnp.pad(x, ((0, 0), (pad, pad), (pad, pad), (0, 0)),
                 constant_values=-jnp.inf)
    out = None
    for kh in range(k):
        for kw in range(k):
            win = xp[:, kh:kh + s * OH:s, kw:kw + s * OW:s, :]
            out = win if out is None else jnp.maximum(out, win)
    return out


def _gap_kernel(x_ref, o_ref):
    # x: (N, H*W, C) bf16 -> o: (N, C) f32   (AdaptiveAvgPool2d((1,1)) + flatten)
    o_ref[...] = jnp.mean(x_ref[...].astype(jnp.float32), axis=1)


@jax.jit
def global_avg_pool(x):
    N, H, W, C = x.shape
    xf = x.reshape(N, H * W, C)
    return pl.pallas_call(
        _gap_kernel,
        out_shape=jax.ShapeDtypeStruct((N, C), jnp.float32))(xf)


@jax.jit
def linear(x, w_t, b):
    """fc: x @ w_t + b via the fused matmul kernel (bias-only epilogue)."""
    return _fused_matmul(x, w_t, shift=b, out_dtype=jnp.float32)


# --------------------------- parameter construction ---------------------------

RESNET152_LAYERS = ((64, 3, 1), (128, 8, 2), (256, 36, 2), (512, 3, 2))
EXPANSION = 4


def _conv_w(key, cin, cout, k):
    fan_in = cin * k * k
    w = jax.random.normal(key, (k, k, cin, cout), jnp.float32) * math.sqrt(2.0 / fan_in)
    return w.astype(jnp.bfloat16)     # MXU-side dtype; BN epilogue stays f32


def _bn_p(key, c):
    """Eval-mode BatchNorm folded into per-channel scale/shift (f32)."""
    k1, k2, k3 = jax.random.split(key, 3)
    gamma = 1.0 + 0.1 * jax.random.normal(k1, (c,), jnp.float32)
    beta = 0.1 * jax.random.normal(k2, (c,), jnp.float32)
    mean = 0.1 * jax.random.normal(k3, (c,), jnp.float32)
    var = jnp.ones((c,), jnp.float32)
    scale = gamma * jax.lax.rsqrt(var + 1e-5)
    shift = beta - mean * scale
    return scale.reshape(1, c), shift.reshape(1, c)


def init_pretrained_conv_params(key, latent_dim):
    state = {"key": key}

    def nxt():
        state["key"], sub = jax.random.split(state["key"])
        return sub

    params = {"conv1": _conv_w(nxt(), 3, 64, 7)}
    params["bn1_s"], params["bn1_b"] = _bn_p(nxt(), 64)

    inplanes = 64
    layers = []
    for planes, nblocks, stride in RESNET152_LAYERS:
        blocks = []
        for bidx in range(nblocks):
            s = stride if bidx == 0 else 1
            blk = {
                "w1": _conv_w(nxt(), inplanes, planes, 1),
                "w2": _conv_w(nxt(), planes, planes, 3),
                "w3": _conv_w(nxt(), planes, planes * EXPANSION, 1),
            }
            blk["bn1_s"], blk["bn1_b"] = _bn_p(nxt(), planes)
            blk["bn2_s"], blk["bn2_b"] = _bn_p(nxt(), planes)
            blk["bn3_s"], blk["bn3_b"] = _bn_p(nxt(), planes * EXPANSION)
            if s != 1 or inplanes != planes * EXPANSION:
                blk["wd"] = _conv_w(nxt(), inplanes, planes * EXPANSION, 1)
                blk["bnd_s"], blk["bnd_b"] = _bn_p(nxt(), planes * EXPANSION)
            blocks.append(blk)
            inplanes = planes * EXPANSION
        layers.append(blocks)
    params["layers"] = layers

    fc_in = 512 * EXPANSION   # 2048 = resnet152 fc.in_features
    params["fc_w_t"] = (jax.random.normal(nxt(), (fc_in, latent_dim), jnp.float32)
                        / math.sqrt(fc_in)).astype(jnp.bfloat16)
    params["fc_b"] = (0.01 * jax.random.normal(nxt(), (latent_dim,), jnp.float32)
                      ).reshape(1, latent_dim)
    return params


# --------------------------------- forward ---------------------------------

def _bottleneck(x, blk, stride):
    out = conv2d_bn(x, blk["w1"], blk["bn1_s"], blk["bn1_b"],
                    stride=1, pad=0, relu=True)
    out = conv2d_bn(out, blk["w2"], blk["bn2_s"], blk["bn2_b"],
                    stride=stride, pad=1, relu=True)
    if "wd" in blk:
        identity = conv2d_bn(x, blk["wd"], blk["bnd_s"], blk["bnd_b"],
                             stride=stride, pad=0, relu=False)
    else:
        identity = x
    # conv3 + bn3 + skip-add + relu, all inside the matmul epilogue
    return conv2d_bn(out, blk["w3"], blk["bn3_s"], blk["bn3_b"], identity,
                     stride=1, pad=0, relu=True)


def pretrained_conv_forward(params, x_nchw):
    """Equivalent of PretrainedConv.forward(x) with x in NCHW float32."""
    x = jnp.transpose(x_nchw, (0, 2, 3, 1)).astype(jnp.bfloat16)   # NCHW -> NHWC
    x = conv2d_bn(x, params["conv1"], params["bn1_s"], params["bn1_b"],
                  stride=2, pad=3, relu=True)                       # 7x7/2 + BN + ReLU
    x = maxpool_3x3_s2(x)
    for (planes, nblocks, stride), layer in zip(RESNET152_LAYERS, params["layers"]):
        for bidx, blk in enumerate(layer):
            x = _bottleneck(x, blk, stride if bidx == 0 else 1)
    feats = global_avg_pool(x)                                      # (N, 2048) f32
    return linear(feats, params["fc_w_t"], params["fc_b"])          # (N, latent_dim)


# ----------------------------------- main -----------------------------------

if __name__ == "__main__":
    latent_dim = 32
    root = jax.random.PRNGKey(0)
    k_params, k_x = jax.random.split(root)

    params = init_pretrained_conv_params(k_params, latent_dim)
    # Small image batch (PyTorch NCHW convention): batch=2, 3 channels, 64x64.
    x = jax.random.normal(k_x, (2, 3, 64, 64), jnp.float32)

    out = pretrained_conv_forward(params, x)
    out = jax.block_until_ready(out)

    assert out.shape == (2, latent_dim), out.shape
    assert out.dtype == jnp.float32
    assert bool(jnp.all(jnp.isfinite(out)))
    print("KERNEL_OK")
</pallas_src>

<mosaic_0001>
module attributes {stable_mosaic.version = 11 : i64} {
  func.func @_fused_mm_kernel(%arg0: i32, %arg1: i32, %arg2: i32, %arg3: memref<256x160xbf16, #tpu.memory_space<vmem>>, %arg4: memref<160x64xbf16, #tpu.memory_space<vmem>>, %arg5: memref<1x64xf32, #tpu.memory_space<vmem>>, %arg6: memref<1x64xf32, #tpu.memory_space<vmem>>, %arg7: memref<256x64xbf16, #tpu.memory_space<vmem>>, %arg8: memref<256x64xf32, #tpu.memory_space<vmem>>) attributes {dimension_semantics = [#tpu.dimension_semantics<parallel>, #tpu.dimension_semantics<parallel>, #tpu.dimension_semantics<arbitrary>], iteration_bounds = array<i64: 8, 1, 1>, scalar_prefetch = 0 : i64, scratch_operands = 1 : i64, tpu.core_type = #tpu.core_type<tc>, window_params = [{transform_indices = @transform_0, window_bounds = array<i64: 256, 160>}, {transform_indices = @transform_1, window_bounds = array<i64: 160, 64>}, {transform_indices = @transform_2, window_bounds = array<i64: 1, 64>}, {transform_indices = @transform_3, window_bounds = array<i64: 1, 64>}, {transform_indices = @transform_4, window_bounds = array<i64: 256, 64>}]} {
    %c0_i32 = arith.constant 0 : i32
    %0 = arith.cmpi eq, %arg2, %c0_i32 : i32
    %1 = arith.extui %0 : i1 to i32
    %c0_i32_0 = arith.constant 0 : i32
    %2 = arith.cmpi ne, %1, %c0_i32_0 : i32
    scf.if %2 {
      %cst_10 = arith.constant 0.000000e+00 : f32
      %12 = vector.broadcast %cst_10 : f32 to vector<256x64xf32>
      %c0_11 = arith.constant 0 : index
      %c0_12 = arith.constant 0 : index
      %13 = vector.load %arg8[%c0_11, %c0_12] : memref<256x64xf32, #tpu.memory_space<vmem>>, vector<256x64xf32>
      tpu.vector_store %arg8[%c0_11, %c0_12], %12 {strides = array<i32>} : memref<256x64xf32, #tpu.memory_space<vmem>>, vector<256x64xf32>,
    } else {
    }
    %c0 = arith.constant 0 : index
    %c0_1 = arith.constant 0 : index
    %3 = vector.load %arg8[%c0, %c0_1] : memref<256x64xf32, #tpu.memory_space<vmem>>, vector<256x64xf32>
    %c0_2 = arith.constant 0 : index
    %c0_3 = arith.constant 0 : index
    %4 = vector.load %arg3[%c0_2, %c0_3] : memref<256x160xbf16, #tpu.memory_space<vmem>>, vector<256x160xbf16>
    %c0_4 = arith.constant 0 : index
    %c0_5 = arith.constant 0 : index
    %5 = vector.load %arg4[%c0_4, %c0_5] : memref<160x64xbf16, #tpu.memory_space<vmem>>, vector<160x64xbf16>
    %cst = arith.constant dense<0.000000e+00> : vector<256x64xf32>
    %6 = tpu.matmul %4, %5, %cst {dimension_numbers = #tpu.dot_dimension_numbers<[1], [0], [0], [1], [0, 0, 1, 1], [], []>} : vector<256x160xbf16>, vector<160x64xbf16>, vector<256x64xf32> -> vector<256x64xf32>
    %7 = arith.addf %3, %6 : vector<256x64xf32>
    %c0_6 = arith.constant 0 : index
    %c0_7 = arith.constant 0 : index
    %8 = vector.load %arg8[%c0_6, %c0_7] : memref<256x64xf32, #tpu.memory_space<vmem>>, vector<256x64xf32>
    tpu.vector_store %arg8[%c0_6, %c0_7], %7 {strides = array<i32>} : memref<256x64xf32, #tpu.memory_space<vmem>>, vector<256x64xf32>,
    %c0_i32_8 = arith.constant 0 : i32
    %9 = arith.cmpi eq, %arg2, %c0_i32_8 : i32
    %10 = arith.extui %9 : i1 to i32
    %c0_i32_9 = arith.constant 0 : i32
    %11 = arith.cmpi ne, %10, %c0_i32_9 : i32
    scf.if %11 {
      %c0_10 = arith.constant 0 : index
      %c0_11 = arith.constant 0 : index
      %12 = vector.load %arg8[%c0_10, %c0_11] : memref<256x64xf32, #tpu.memory_space<vmem>>, vector<256x64xf32>
      %c0_12 = arith.constant 0 : index
      %c0_13 = arith.constant 0 : index
      %13 = vector.load %arg5[%c0_12, %c0_13] : memref<1x64xf32, #tpu.memory_space<vmem>>, vector<1x64xf32>
      %14 = vector.broadcast %13 : vector<1x64xf32> to vector<256x64xf32>
      %15 = arith.mulf %12, %14 : vector<256x64xf32>
      %c0_14 = arith.constant 0 : index
      %c0_15 = arith.constant 0 : index
      %16 = vector.load %arg6[%c0_14, %c0_15] : memref<1x64xf32, #tpu.memory_space<vmem>>, vector<1x64xf32>
      %17 = vector.broadcast %16 : vector<1x64xf32> to vector<256x64xf32>
      %18 = arith.addf %15, %17 : vector<256x64xf32>
      %cst_16 = arith.constant 0.000000e+00 : f32
      %19 = vector.broadcast %cst_16 : f32 to vector<256x64xf32>
      %20 = arith.maximumf %18, %19 : vector<256x64xf32>
      %21 = arith.truncf %20 : vector<256x64xf32> to vector<256x64xbf16>
      %c0_17 = arith.constant 0 : index
      %c0_18 = arith.constant 0 : index
      %22 = vector.load %arg7[%c0_17, %c0_18] : memref<256x64xbf16, #tpu.memory_space<vmem>>, vector<256x64xbf16>
      tpu.vector_store %arg7[%c0_17, %c0_18], %21 {strides = array<i32>} : memref<256x64xbf16, #tpu.memory_space<vmem>>, vector<256x64xbf16>,
    } else {
    }
    return
  }
  func.func @transform_0(%arg0: i32, %arg1: i32, %arg2: i32) -> (i32, i32) {
    %c0_i32 = arith.constant 0 : i32
    return %arg0, %arg2 : i32, i32
  }
  func.func @transform_1(%arg0: i32, %arg1: i32, %arg2: i32) -> (i32, i32) {
    %c0_i32 = arith.constant 0 : i32
    return %arg2, %arg1 : i32, i32
  }
  func.func @transform_2(%arg0: i32, %arg1: i32, %arg2: i32) -> (i32, i32) {
    %c0_i32 = arith.constant 0 : i32
    %c0_i32_0 = arith.constant 0 : i32
    return %c0_i32, %arg1 : i32, i32
  }
  func.func @transform_3(%arg0: i32, %arg1: i32, %arg2: i32) -> (i32, i32) {
    %c0_i32 = arith.constant 0 : i32
    %c0_i32_0 = arith.constant 0 : i32
    return %c0_i32, %arg1 : i32, i32
  }
  func.func @transform_4(%arg0: i32, %arg1: i32, %arg2: i32) -> (i32, i32) {
    %c0_i32 = arith.constant 0 : i32
    return %arg0, %arg1 : i32, i32
  }
}

</mosaic_0001>

<llo_original>
// kernel: conv2d_bn.1
$region0: #{conv2d_bn.1}
  #allocation0 [shape = 'u32[]', space=smem, size = 0x4, offset = 0x4, fixed_abs, tag = 'smem constant byte address 0x4 - core index']
  #allocation1 [shape = 'u32[144,128]{1,0:T(1,128)}', space=vmem, size = 0x12000, scoped, tag = 'internal scratch']
  #allocation2 [shape = 'f32[256,64]{1,0:T(8,128)}', space=vmem, size = 0x20000, scoped, tag = 'scratch operand']
  %s0 = inlined_call_operand.vmem [shape: bf16[2048,160], index: 0, kind: input, shape index: {}]
  %s1 = inlined_call_operand.vmem [shape: bf16[160,64], index: 1, kind: input, shape index: {}]
  %s2 = inlined_call_operand.vmem [shape: f32[1,64], index: 2, kind: input, shape index: {}]
  %s3 = inlined_call_operand.vmem [shape: f32[1,64], index: 3, kind: input, shape index: {}]
  %s4 = inlined_call_operand.hbm [shape: bf16[2048,64], index: 4, kind: output, shape index: {}]
  %s5 = sld [smem:[#allocation0]]
  $region57: #{conv2d_bn.1} parent=0
    _
  %s7 = ssub.s32 1, %s5
  %s8 = scalar_select 0, %s7, %s5
  $region1: #{conv2d_bn.1} parent=0
    #allocation3 [shape = 'u8[131072]{0}', space=vmem, size = 0x20000, scoped, tag = 'output window, operand 0']
    #allocation4 [shape = 's32[2]{0}', space=sflag, size = 0x8, scoped, tag = 'scoped memory for conv2d_bn.1']
    %9 = vsyncpa [#allocation4], 0
    %s10 = scalar_lea.sflag [#allocation4], 1
    %11 = vsyncpa %s10, 0
    loop: start=0, step=1, limit=10
    $region2: #{conv2d_bn.1} parent=1 // loop_pre_header
      _
    $region3: #{conv2d_bn.1} parent=1 // loop_header
      %s13 = sphi 0, %s17
      %p14 = scmp.ge.s32.totalorder %s13, 10
      %s20 = sphi 0, %s39
      %s21 = sphi 0, %s35
      %s22 = sphi 0, %s31
      %s23 = sphi 0, %s20
      %s24 = sphi 0, %s21
      %s25 = sphi 0, %s22
      %s26 = sphi 0, %s23
      %s27 = sphi 0, %s24
      %s28 = sphi 0, %s25
      %s44 = sphi 0, %s46
      %s47 = sphi 0, %s44
      %s48 = sphi 0, %s47
      %s64 = sphi 0, %s48
      %s72 = sphi 0, %s74
      %s75 = sphi 0, %s72
      %s76 = sphi 0, %s75
      %s92 = sphi 0, %s76
      %s98 = sphi 0, %s100
      %s101 = sphi 0, %s98
      %s102 = sphi 0, %s101
      %s118 = sphi 0, %s102
      %s124 = sphi 0, %s126
      %s127 = sphi 0, %s124
      %s128 = sphi 0, %s127
      %s144 = sphi 0, %s128
      %s152 = sphi 0, %s154
      %s155 = sphi 0, %s152
      %s156 = sphi 0, %s155
      %s172 = sphi 0, %s156
    $region4: #{conv2d_bn.1} parent=1 // loop_header_branch
      %16 = sbr.rel (%p14) target = $region8
    $region5: #{conv2d_bn.1} parent=1 // loop_body
      %s18 = ssub.s32 %s13, 1
      %s19 = ssub.s32 %s13, 2
      %s29 = sadd.s32 1, %s22
      %p30 = scmp.ge.s32.totalorder %s29, 1
      %s31 = scalar_select %p30, 0, %s29
      %s32 = sadd.s32 1, %s21
      %s33 = scalar_select %p30, %s32, %s21
      %p34 = scmp.ge.s32.totalorder %s33, 1
      %s35 = scalar_select %p34, 0, %s33
      %s36 = sadd.s32 1, %s20
      %s37 = scalar_select %p34, %s36, %s20
      %p38 = scmp.ge.s32.totalorder %s37, 8
      %s39 = scalar_select %p38, 0, %s37
      %s40 = ssub.s32 %s20, %s39
      %s41 = ssub.s32 %s22, %s31
      %s42 = sor.u32 %s40, %s41
      %p43 = scmp.eq.s32.totalorder %s42, 0
      %s45 = sadd.s32 %s44, 1
      %s46 = scalar_select %p43, %s44, %s45
      %p49 = pneg %p43
      %p50 = scmp.eq.s32.totalorder %s13, 7
      %p51 = por %p49, %p50
      %p52 = scmp.ne.s32.totalorder %s44, %s47
      %p53 = scmp.eq.s32.totalorder %s13, 0
      %p54 = por %p52, %p53
      %p55 = scmp.ne.s32.totalorder %s44, %s47
      %p56 = scmp.eq.s32.totalorder %s18, 7
      %p57 = por %p55, %p56
      %p58 = scmp.ne.s32.totalorder %s47, %s48
      %p59 = scmp.eq.s32.totalorder %s18, 0
      %p60 = por %p58, %p59
      %p61 = scmp.ne.s32.totalorder %s47, %s48
      %p62 = scmp.eq.s32.totalorder %s19, 7
      %p63 = por %p61, %p62
      %p65 = scmp.ne.s32.totalorder %s48, %s64
      %p66 = scmp.eq.s32.totalorder %s19, 0
      %p67 = por %p65, %p66
      %s68 = ssub.s32 %s22, %s31
      %s69 = ssub.s32 %s21, %s35
      %s70 = sor.u32 %s68, %s69
      %p71 = scmp.eq.s32.totalorder %s70, 0
      %s73 = sadd.s32 %s72, 1
      %s74 = scalar_select %p71, %s72, %s73
      %p77 = pneg %p71
      %p78 = scmp.eq.s32.totalorder %s13, 7
      %p79 = por %p77, %p78
      %p80 = scmp.ne.s32.totalorder %s72, %s75
      %p81 = scmp.eq.s32.totalorder %s13, 0
      %p82 = por %p80, %p81
      %p83 = scmp.ne.s32.totalorder %s72, %s75
      %p84 = scmp.eq.s32.totalorder %s18, 7
      %p85 = por %p83, %p84
      %p86 = scmp.ne.s32.totalorder %s75, %s76
      %p87 = scmp.eq.s32.totalorder %s18, 0
      %p88 = por %p86, %p87
      %p89 = scmp.ne.s32.totalorder %s75, %s76
      %p90 = scmp.eq.s32.totalorder %s19, 7
      %p91 = por %p89, %p90
      %p93 = scmp.ne.s32.totalorder %s76, %s92
      %p94 = scmp.eq.s32.totalorder %s19, 0
      %p95 = por %p93, %p94
      %s96 = ssub.s32 %s21, %s35
      %p97 = scmp.eq.s32.totalorder %s96, 0
      %s99 = sadd.s32 %s98, 1
      %s100 = scalar_select %p97, %s98, %s99
      %p103 = pneg %p97
      %p104 = scmp.eq.s32.totalorder %s13, 7
      %p105 = por %p103, %p104
      %p106 = scmp.ne.s32.totalorder %s98, %s101
      %p107 = scmp.eq.s32.totalorder %s13, 0
      %p108 = por %p106, %p107
      %p109 = scmp.ne.s32.totalorder %s98, %s101
      %p110 = scmp.eq.s32.totalorder %s18, 7
      %p111 = por %p109, %p110
      %p112 = scmp.ne.s32.totalorder %s101, %s102
      %p113 = scmp.eq.s32.totalorder %s18, 0
      %p114 = por %p112, %p113
      %p115 = scmp.ne.s32.totalorder %s101, %s102
      %p116 = scmp.eq.s32.totalorder %s19, 7
      %p117 = por %p115, %p116
      %p119 = scmp.ne.s32.totalorder %s102, %s118
      %p120 = scmp.eq.s32.totalorder %s19, 0
      %p121 = por %p119, %p120
      %s122 = ssub.s32 %s21, %s35
      %p123 = scmp.eq.s32.totalorder %s122, 0
      %s125 = sadd.s32 %s124, 1
      %s126 = scalar_select %p123, %s124, %s125
      %p129 = pneg %p123
      %p130 = scmp.eq.s32.totalorder %s13, 7
      %p131 = por %p129, %p130
      %p132 = scmp.ne.s32.totalorder %s124, %s127
      %p133 = scmp.eq.s32.totalorder %s13, 0
      %p134 = por %p132, %p133
      %p135 = scmp.ne.s32.totalorder %s124, %s127
      %p136 = scmp.eq.s32.totalorder %s18, 7
      %p137 = por %p135, %p136
      %p138 = scmp.ne.s32.totalorder %s127, %s128
      %p139 = scmp.eq.s32.totalorder %s18, 0
      %p140 = por %p138, %p139
      %p141 = scmp.ne.s32.totalorder %s127, %s128
      %p142 = scmp.eq.s32.totalorder %s19, 7
      %p143 = por %p141, %p142
      %p145 = scmp.ne.s32.totalorder %s128, %s144
      %p146 = scmp.eq.s32.totalorder %s19, 0
      %p147 = por %p145, %p146
      %s148 = ssub.s32 %s20, %s39
      %s149 = ssub.s32 %s21, %s35
      %s150 = sor.u32 %s148, %s149
      %p151 = scmp.eq.s32.totalorder %s150, 0
      %s153 = sadd.s32 %s152, 1
      %s154 = scalar_select %p151, %s152, %s153
      %p157 = pneg %p151
      %p158 = scmp.eq.s32.totalorder %s13, 7
      %p159 = por %p157, %p158
      %p160 = scmp.ne.s32.totalorder %s152, %s155
      %p161 = scmp.eq.s32.totalorder %s13, 0
      %p162 = por %p160, %p161
      %p163 = scmp.ne.s32.totalorder %s152, %s155
      %p164 = scmp.eq.s32.totalorder %s18, 7
      %p165 = por %p163, %p164
      %p166 = scmp.ne.s32.totalorder %s155, %s156
      %p167 = scmp.eq.s32.totalorder %s18, 0
      %p168 = por %p166, %p167
      %p169 = scmp.ne.s32.totalorder %s155, %s156
      %p170 = scmp.eq.s32.totalorder %s19, 7
      %p171 = por %p169, %p170
      %p173 = scmp.ne.s32.totalorder %s156, %s172
      %p174 = scmp.eq.s32.totalorder %s19, 0
      %p175 = por %p173, %p174
      %p176 = scmp.le.s32.totalorder 1, %s13
      %p177 = scmp.lt.s32.totalorder %s13, 9
      %p178 = pnand %p176, %p177
      %p179 = pneg %p178
      // Predicated region
      $region9: #{conv2d_bn.1} parent=5 // pred_check
        _
      $region10: #{conv2d_bn.1} parent=5 // pred_check_branch
        %181 = sbr.rel (%p178) target = $region12
      $region11: #{conv2d_bn.1} parent=5 // pred_region
        %s182 = ssub.s32 %s13, 1
        // Predicated region
        $region13: #{conv2d_bn.1} parent=11 // pred_check
          %p183 = pneg %p88
        $region14: #{conv2d_bn.1} parent=11 // pred_check_branch
          %185 = sbr.rel (%p183) target = $region16
        $region15: #{conv2d_bn.1} parent=11 // pred_region
          %s186 = smul.u32 20, %s25
          %p187 = scmp.lt.s32.totalorder %s186, 19
          %s188 = scalar_select %p187, %s186, 19
          %p189 = scmp.lt.s32.totalorder %s24, 0
          %s190 = scalar_select %p189, %s24, 0
          %s191 = sadd.s32 %s190, %s188
          %s192 = smul.addr %s191, 4
          %s193 = scalar_lea.vmem %s1, %s192
          %s194 = smul.u32 20, %s25
        $region16: #{conv2d_bn.1} parent=11 // pred_fallthru
          _
        // Predicated region
        $region17: #{conv2d_bn.1} parent=11 // pred_check
          %p195 = pneg %p114
        $region18: #{conv2d_bn.1} parent=11 // pred_check_branch
          %197 = sbr.rel (%p195) target = $region20
        $region19: #{conv2d_bn.1} parent=11 // pred_region
          %p198 = scmp.lt.s32.totalorder %s24, 0
          %s199 = scalar_select %p198, %s24, 0
          %s200 = scalar_lea.vmem %s2, %s199
        $region20: #{conv2d_bn.1} parent=11 // pred_fallthru
          _
        // Predicated region
        $region21: #{conv2d_bn.1} parent=11 // pred_check
          %p201 = pneg %p140
        $region22: #{conv2d_bn.1} parent=11 // pred_check_branch
          %203 = sbr.rel (%p201) target = $region24
        $region23: #{conv2d_bn.1} parent=11 // pred_region
          %p204 = scmp.lt.s32.totalorder %s24, 0
          %s205 = scalar_select %p204, %s24, 0
          %s206 = scalar_lea.vmem %s3, %s205
        $region24: #{conv2d_bn.1} parent=11 // pred_fallthru
          _
      $region12: #{conv2d_bn.1} parent=5 // pred_fallthru
        _
      %p207 = scmp.lt.s32.totalorder %s13, 8
      // Predicated region
      $region25: #{conv2d_bn.1} parent=5 // pred_check
        %p208 = pneg %p207
      $region26: #{conv2d_bn.1} parent=5 // pred_check_branch
        %210 = sbr.rel (%p208) target = $region28
      $region27: #{conv2d_bn.1} parent=5 // pred_region
        // Predicated region
        $region29: #{conv2d_bn.1} parent=27 // pred_check
          %p211 = pneg %p54
        $region30: #{conv2d_bn.1} parent=27 // pred_check_branch
          %213 = sbr.rel (%p211) target = $region32
        $region31: #{conv2d_bn.1} parent=27 // pred_region
          %s214 = smul.u32 32, %s20
          %s215 = smul.u32 2, %s22
          %p216 = scmp.lt.s32.totalorder %s214, 255
          %s217 = scalar_select %p216, %s214, 255
          %p218 = scmp.lt.s32.totalorder %s215, 1
          %s219 = scalar_select %p218, %s215, 1
          %s220 = smul.addr %s217, 2
          %s221 = sadd.s32 %s219, %s220
          %s222 = smul.addr %s221, 4
          %s223 = scalar_lea.vmem %s0, %s222
          %s224 = smul.u32 32, %s20
          %s225 = smul.u32 2, %s22
        $region32: #{conv2d_bn.1} parent=27 // pred_fallthru
          _
      $region28: #{conv2d_bn.1} parent=5 // pred_fallthru
        _
      %p226 = scmp.le.s32.totalorder 1, %s13
      %p227 = scmp.lt.s32.totalorder %s13, 9
      %p228 = pnand %p226, %p227
      %p229 = pneg %p228
      // Predicated region
      $region33: #{conv2d_bn.1} parent=5 // pred_check
        _
      $region34: #{conv2d_bn.1} parent=5 // pred_check_branch
        %231 = sbr.rel (%p228) target = $region36
      $region35: #{conv2d_bn.1} parent=5 // pred_region
        %s232 = ssub.s32 %s13, 1
        %s233 = smul.u32 32, %s23
        %s234 = smul.u32 2, %s25
        %p235 = scmp.lt.s32.totalorder %s233, 255
        %s236 = scalar_select %p235, %s233, 255
        %p237 = scmp.lt.s32.totalorder %s234, 1
        %s238 = scalar_select %p237, %s234, 1
        %s239 = smul.addr %s236, 2
        %s240 = sadd.s32 %s238, %s239
        %s241 = smul.addr %s240, 4
        %s242 = scalar_lea.vmem %s0, %s241
        %p243 = pneg %p60
        %p244 = pneg %p57
        %s245 = smul.u32 20, %s25
        %p246 = scmp.lt.s32.totalorder %s245, 19
        %s247 = scalar_select %p246, %s245, 19
        %p248 = scmp.lt.s32.totalorder %s24, 0
        %s249 = scalar_select %p248, %s24, 0
        %s250 = sadd.s32 %s249, %s247
        %s251 = smul.addr %s250, 4
        %s252 = scalar_lea.vmem %s1, %s251
        %p253 = pneg %p88
        %p254 = pneg %p85
        %p255 = scmp.lt.s32.totalorder %s24, 0
        %s256 = scalar_select %p255, %s24, 0
        %s257 = scalar_lea.vmem %s2, %s256
        %p258 = pneg %p114
        %p259 = pneg %p111
        %p260 = scmp.lt.s32.totalorder %s24, 0
        %s261 = scalar_select %p260, %s24, 0
        %s262 = scalar_lea.vmem %s3, %s261
        %p263 = pneg %p140
        %p264 = pneg %p137
        %p265 = pneg %p168
        %p266 = pneg %p165
        %s267 = sand.u32 %s155, 1
        %s268 = scalar_lea.sflag [#allocation4], %s267
        %s269 = sand.u32 %s155, 1
        %s270 = smul.addr %s269, 128
        %s271 = scalar_lea.vmem [#allocation3], %s270
        %s272 = smul.u32 32, %s23
        %s273 = smul.u32 2, %s25
        %p274 = scmp.lt.s32.totalorder %s272, 255
        %s275 = scalar_select %p274, %s272, 255
        %p276 = scmp.lt.s32.totalorder %s273, 1
        %s277 = scalar_select %p276, %s273, 1
        %s278 = smul.addr %s275, 2
        %s279 = sadd.s32 %s277, %s278
        %s280 = smul.addr %s279, 4
        %s281 = scalar_lea.vmem %s0, %s280
        %s282 = smul.u32 32, %s23
        %s283 = smul.u32 2, %s25
        %s284 = smul.u32 20, %s25
        %p285 = scmp.lt.s32.totalorder %s284, 19
        %s286 = scalar_select %p285, %s284, 19
        %p287 = scmp.lt.s32.totalorder %s24, 0
        %s288 = scalar_select %p287, %s24, 0
        %s289 = sadd.s32 %s288, %s286
        %s290 = smul.addr %s289, 4
        %s291 = scalar_lea.vmem %s1, %s290
        %s292 = smul.u32 20, %s25
        %p293 = scmp.lt.s32.totalorder %s24, 0
        %s294 = scalar_select %p293, %s24, 0
        %s295 = scalar_lea.vmem %s2, %s294
        %p296 = scmp.lt.s32.totalorder %s24, 0
        %s297 = scalar_select %p296, %s24, 0
        %s298 = scalar_lea.vmem %s3, %s297
        %s299 = smul.u32 32, %s23
        %p301 = scmp.eq.s32.totalorder %s25, 0
        // Predicated region
        $region37: #{conv2d_bn.1} parent=35 // pred_check
          %p302 = pneg %p301
        $region38: #{conv2d_bn.1} parent=35 // pred_check_branch
          %304 = sbr.rel (%p302) target = $region40
        $region39: #{conv2d_bn.1} parent=35 // pred_region
          %vm305 = vcmask 523264
          %306 = vst.msk [vmem:[#allocation2] sm:$0xff] %vm305, 0.0
          %307 = vst.msk [vmem:[#allocation2 + $0x8] sm:$0xff] %vm305, 0.0
          %308 = vst.msk [vmem:[#allocation2 + $0x10] sm:$0xff] %vm305, 0.0
          %309 = vst.msk [vmem:[#allocation2 + $0x18] sm:$0xff] %vm305, 0.0
          %310 = vst.msk [vmem:[#allocation2 + $0x20] sm:$0xff] %vm305, 0.0
          %311 = vst.msk [vmem:[#allocation2 + $0x28] sm:$0xff] %vm305, 0.0
          %312 = vst.msk [vmem:[#allocation2 + $0x30] sm:$0xff] %vm305, 0.0
          %313 = vst.msk [vmem:[#allocation2 + $0x38] sm:$0xff] %vm305, 0.0
          %314 = vst.msk [vmem:[#allocation2 + $0x40] sm:$0xff] %vm305, 0.0
          %315 = vst.msk [vmem:[#allocation2 + $0x48] sm:$0xff] %vm305, 0.0
          %316 = vst.msk [vmem:[#allocation2 + $0x50] sm:$0xff] %vm305, 0.0
          %317 = vst.msk [vmem:[#allocation2 + $0x58] sm:$0xff] %vm305, 0.0
          %318 = vst.msk [vmem:[#allocation2 + $0x60] sm:$0xff] %vm305, 0.0
          %319 = vst.msk [vmem:[#allocation2 + $0x68] sm:$0xff] %vm305, 0.0
          %320 = vst.msk [vmem:[#allocation2 + $0x70] sm:$0xff] %vm305, 0.0
          %321 = vst.msk [vmem:[#allocation2 + $0x78] sm:$0xff] %vm305, 0.0
          %322 = vst.msk [vmem:[#allocation2 + $0x80] sm:$0xff] %vm305, 0.0
          %323 = vst.msk [vmem:[#allocation2 + $0x88] sm:$0xff] %vm305, 0.0
          %324 = vst.msk [vmem:[#allocation2 + $0x90] sm:$0xff] %vm305, 0.0
          %325 = vst.msk [vmem:[#allocation2 + $0x98] sm:$0xff] %vm305, 0.0
          %326 = vst.msk [vmem:[#allocation2 + $0xa0] sm:$0xff] %vm305, 0.0
          %327 = vst.msk [vmem:[#allocation2 + $0xa8] sm:$0xff] %vm305, 0.0
          %328 = vst.msk [vmem:[#allocation2 + $0xb0] sm:$0xff] %vm305, 0.0
          %329 = vst.msk [vmem:[#allocation2 + $0xb8] sm:$0xff] %vm305, 0.0
          %330 = vst.msk [vmem:[#allocation2 + $0xc0] sm:$0xff] %vm305, 0.0
          %331 = vst.msk [vmem:[#allocation2 + $0xc8] sm:$0xff] %vm305, 0.0
          %332 = vst.msk [vmem:[#allocation2 + $0xd0] sm:$0xff] %vm305, 0.0
          %333 = vst.msk [vmem:[#allocation2 + $0xd8] sm:$0xff] %vm305, 0.0
          %334 = vst.msk [vmem:[#allocation2 + $0xe0] sm:$0xff] %vm305, 0.0
          %335 = vst.msk [vmem:[#allocation2 + $0xe8] sm:$0xff] %vm305, 0.0
          %336 = vst.msk [vmem:[#allocation2 + $0xf0] sm:$0xff] %vm305, 0.0
          %337 = vst.msk [vmem:[#allocation2 + $0xf8] sm:$0xff] %vm305, 0.0
        $region40: #{conv2d_bn.1} parent=35 // pred_fallthru
          _
        %v338 = vld [vmem:[#allocation2] sm:$0xff]
        %v339 = vld [vmem:[#allocation2 + $0x8] sm:$0xff]
        %v340 = vld [vmem:[#allocation2 + $0x10] sm:$0xff]
        %v341 = vld [vmem:[#allocation2 + $0x18] sm:$0xff]
        %v342 = vld [vmem:[#allocation2 + $0x20] sm:$0xff]
        %v343 = vld [vmem:[#allocation2 + $0x28] sm:$0xff]
        %v344 = vld [vmem:[#allocation2 + $0x30] sm:$0xff]
        %v345 = vld [vmem:[#allocation2 + $0x38] sm:$0xff]
        %v346 = vld [vmem:[#allocation2 + $0x40] sm:$0xff]
        %v347 = vld [vmem:[#allocation2 + $0x48] sm:$0xff]
        %v348 = vld [vmem:[#allocation2 + $0x50] sm:$0xff]
        %v349 = vld [vmem:[#allocation2 + $0x58] sm:$0xff]
        %v350 = vld [vmem:[#allocation2 + $0x60] sm:$0xff]
        %v351 = vld [vmem:[#allocation2 + $0x68] sm:$0xff]
        %v352 = vld [vmem:[#allocation2 + $0x70] sm:$0xff]
        %v353 = vld [vmem:[#allocation2 + $0x78] sm:$0xff]
        %v354 = vld [vmem:[#allocation2 + $0x80] sm:$0xff]
        %v355 = vld [vmem:[#allocation2 + $0x88] sm:$0xff]
        %v356 = vld [vmem:[#allocation2 + $0x90] sm:$0xff]
        %v357 = vld [vmem:[#allocation2 + $0x98] sm:$0xff]
        %v358 = vld [vmem:[#allocation2 + $0xa0] sm:$0xff]
        %v359 = vld [vmem:[#allocation2 + $0xa8] sm:$0xff]
        %v360 = vld [vmem:[#allocation2 + $0xb0] sm:$0xff]
        %v361 = vld [vmem:[#allocation2 + $0xb8] sm:$0xff]
        %v362 = vld [vmem:[#allocation2 + $0xc0] sm:$0xff]
        %v363 = vld [vmem:[#allocation2 + $0xc8] sm:$0xff]
        %v364 = vld [vmem:[#allocation2 + $0xd0] sm:$0xff]
        %v365 = vld [vmem:[#allocation2 + $0xd8] sm:$0xff]
        %v366 = vld [vmem:[#allocation2 + $0xe0] sm:$0xff]
        %v367 = vld [vmem:[#allocation2 + $0xe8] sm:$0xff]
        %v368 = vld [vmem:[#allocation2 + $0xf0] sm:$0xff]
        %v369 = vld [vmem:[#allocation2 + $0xf8] sm:$0xff]
        %v370 = vld [vmem:[%s281] sm:$0xff]
        %v371 = vld [vmem:[%s281 + $0x8] sm:$0xff]
        %v372 = vld [vmem:[%s281 + $0x10] sm:$0xff]
        %v373 = vld [vmem:[%s281 + $0x18] sm:$0xff]
        %v374 = vld [vmem:[%s281 + $0x20] sm:$0xff]
        %v375 = vld [vmem:[%s281 + $0x28] sm:$0xff]
        %v376 = vld [vmem:[%s281 + $0x30] sm:$0xff]
        %v377 = vld [vmem:[%s281 + $0x38] sm:$0xff]
        %v378 = vld [vmem:[%s281 + $0x40] sm:$0xff]
        %v379 = vld [vmem:[%s281 + $0x48] sm:$0xff]
        %v380 = vld [vmem:[%s281 + $0x50] sm:$0xff]
        %v381 = vld [vmem:[%s281 + $0x58] sm:$0xff]
        %v382 = vld [vmem:[%s281 + $0x60] sm:$0xff]
        %v383 = vld [vmem:[%s281 + $0x68] sm:$0xff]
        %v384 = vld [vmem:[%s281 + $0x70] sm:$0xff]
        %v385 = vld [vmem:[%s281 + $0x78] sm:$0xff]
        %v386 = vld [vmem:[%s281 + $0x80] sm:$0xff]
        %v387 = vld [vmem:[%s281 + $0x88] sm:$0xff]
        %v388 = vld [vmem:[%s281 + $0x90] sm:$0xff]
        %v389 = vld [vmem:[%s281 + $0x98] sm:$0xff]
        %v390 = vld [vmem:[%s281 + $0xa0] sm:$0xff]
        %v391 = vld [vmem:[%s281 + $0xa8] sm:$0xff]
        %v392 = vld [vmem:[%s281 + $0xb0] sm:$0xff]
        %v393 = vld [vmem:[%s281 + $0xb8] sm:$0xff]
        %v394 = vld [vmem:[%s281 + $0xc0] sm:$0xff]
        %v395 = vld [vmem:[%s281 + $0xc8] sm:$0xff]
        %v396 = vld [vmem:[%s281 + $0xd0] sm:$0xff]
        %v397 = vld [vmem:[%s281 + $0xd8] sm:$0xff]
        %v398 = vld [vmem:[%s281 + $0xe0] sm:$0xff]
        %v399 = vld [vmem:[%s281 + $0xe8] sm:$0xff]
        %v400 = vld [vmem:[%s281 + $0xf0] sm:$0xff]
        %v401 = vld [vmem:[%s281 + $0xf8] sm:$0xff]
        %v402 = vld [vmem:[%s291] sm:$0xf]
        %v403 = vld [vmem:[%s291 + $0x4] sm:$0xf]
        %v404 = vld [vmem:[%s291 + $0x8] sm:$0xf]
        %v405 = vld [vmem:[%s291 + $0xc] sm:$0xf]
        %v406 = vld [vmem:[%s291 + $0x10] sm:$0xf]
        %v407 = vld [vmem:[%s291 + $0x14] sm:$0xf]
        %v408 = vld [vmem:[%s291 + $0x18] sm:$0xf]
        %v409 = vld [vmem:[%s291 + $0x1c] sm:$0xf]
        %v410 = vld [vmem:[%s291 + $0x20] sm:$0xf]
        %v411 = vld [vmem:[%s291 + $0x24] sm:$0xf]
        %v412 = vld [vmem:[%s291 + $0x28] sm:$0xf]
        %v413 = vld [vmem:[%s291 + $0x2c] sm:$0xf]
        %v414 = vld [vmem:[%s291 + $0x30] sm:$0xf]
        %v415 = vld [vmem:[%s291 + $0x34] sm:$0xf]
        %v416 = vld [vmem:[%s291 + $0x38] sm:$0xf]
        %v417 = vld [vmem:[%s291 + $0x3c] sm:$0xf]
        %v418 = vld [vmem:[%s291 + $0x40] sm:$0xf]
        %v419 = vld [vmem:[%s291 + $0x44] sm:$0xf]
        %v420 = vld [vmem:[%s291 + $0x48] sm:$0xf]
        %v421 = vld [vmem:[%s291 + $0x4c] sm:$0xf]
        %v454 = vunpack.c.l.b16 %v370
        %v455 = vunpack.c.h.b16 %v370
        %v456 = vunpack.c.l.b16 %v371
        %v457 = vunpack.c.h.b16 %v371
        %v458 = vunpack.c.l.b16 %v372
        %v459 = vunpack.c.h.b16 %v372
        %v460 = vunpack.c.l.b16 %v373
        %v461 = vunpack.c.h.b16 %v373
        %v462 = vunpack.c.l.b16 %v374
        %v463 = vunpack.c.h.b16 %v374
        %v464 = vunpack.c.l.b16 %v375
        %v465 = vunpack.c.h.b16 %v375
        %v466 = vunpack.c.l.b16 %v376
        %v467 = vunpack.c.h.b16 %v376
        %v468 = vunpack.c.l.b16 %v377
        %v469 = vunpack.c.h.b16 %v377
        %v470 = vunpack.c.l.b16 %v378
        %v471 = vunpack.c.h.b16 %v378
        %v472 = vunpack.c.l.b16 %v379
        %v473 = vunpack.c.h.b16 %v379
        %v474 = vunpack.c.l.b16 %v380
        %v475 = vunpack.c.h.b16 %v380
        %v476 = vunpack.c.l.b16 %v381
        %v477 = vunpack.c.h.b16 %v381
        %v478 = vunpack.c.l.b16 %v382
        %v479 = vunpack.c.h.b16 %v382
        %v480 = vunpack.c.l.b16 %v383
        %v481 = vunpack.c.h.b16 %v383
        %v482 = vunpack.c.l.b16 %v384
        %v483 = vunpack.c.h.b16 %v384
        %v484 = vunpack.c.l.b16 %v385
        %v485 = vunpack.c.h.b16 %v385
        %v486 = vunpack.c.l.b16 %v386
        %v487 = vunpack.c.h.b16 %v386
        %v488 = vunpack.c.l.b16 %v387
        %v489 = vunpack.c.h.b16 %v387
        %v490 = vunpack.c.l.b16 %v388
        %v491 = vunpack.c.h.b16 %v388
        %v492 = vunpack.c.l.b16 %v389
        %v493 = vunpack.c.h.b16 %v389
        %v494 = vunpack.c.l.b16 %v390
        %v495 = vunpack.c.h.b16 %v390
        %v496 = vunpack.c.l.b16 %v391
        %v497 = vunpack.c.h.b16 %v391
        %v498 = vunpack.c.l.b16 %v392
        %v499 = vunpack.c.h.b16 %v392
        %v500 = vunpack.c.l.b16 %v393
        %v501 = vunpack.c.h.b16 %v393
        %v502 = vunpack.c.l.b16 %v394
        %v503 = vunpack.c.h.b16 %v394
        %v504 = vunpack.c.l.b16 %v395
        %v505 = vunpack.c.h.b16 %v395
        %v506 = vunpack.c.l.b16 %v396
        %v507 = vunpack.c.h.b16 %v396
        %v508 = vunpack.c.l.b16 %v397
        %v509 = vunpack.c.h.b16 %v397
        %v510 = vunpack.c.l.b16 %v398
        %v511 = vunpack.c.h.b16 %v398
        %v512 = vunpack.c.l.b16 %v399
        %v513 = vunpack.c.h.b16 %v399
        %v514 = vunpack.c.l.b16 %v400
        %v515 = vunpack.c.h.b16 %v400
        %v516 = vunpack.c.l.b16 %v401
        %v517 = vunpack.c.h.b16 %v401
        %v518 = vpack.c.b16 %v456, %v454
        %v519 = vpack.c.b16 %v457, %v455
        %v520 = vpack.c.b16 %v460, %v458
        %v521 = vpack.c.b16 %v461, %v459
        %v522 = vpack.c.b16 %v464, %v462
        %v523 = vpack.c.b16 %v465, %v463
        %v524 = vpack.c.b16 %v468, %v466
        %v525 = vpack.c.b16 %v469, %v467
        %v526 = vpack.c.b16 %v472, %v470
        %v527 = vpack.c.b16 %v473, %v471
        %v528 = vpack.c.b16 %v476, %v474
        %v529 = vpack.c.b16 %v477, %v475
        %v530 = vpack.c.b16 %v480, %v478
        %v531 = vpack.c.b16 %v481, %v479
        %v532 = vpack.c.b16 %v484, %v482
        %v533 = vpack.c.b16 %v485, %v483
        %v534 = vpack.c.b16 %v488, %v486
        %v535 = vpack.c.b16 %v489, %v487
        %v536 = vpack.c.b16 %v492, %v490
        %v537 = vpack.c.b16 %v493, %v491
        %v538 = vpack.c.b16 %v496, %v494
        %v539 = vpack.c.b16 %v497, %v495
        %v540 = vpack.c.b16 %v500, %v498
        %v541 = vpack.c.b16 %v501, %v499
        %v542 = vpack.c.b16 %v504, %v502
        %v543 = vpack.c.b16 %v505, %v503
        %v544 = vpack.c.b16 %v508, %v506
        %v545 = vpack.c.b16 %v509, %v507
        %v546 = vpack.c.b16 %v512, %v510
        %v547 = vpack.c.b16 %v513, %v511
        %v548 = vpack.c.b16 %v516, %v514
        %v549 = vpack.c.b16 %v517, %v515
        %v586 = vunpack.c.l.b16 %v402
        %v587 = vunpack.c.l.b16 %v403
        %v588 = vunpack.c.l.b16 %v404
        %v589 = vunpack.c.l.b16 %v405
        %v590 = vunpack.c.l.b16 %v406
        %v591 = vunpack.c.l.b16 %v407
        %v592 = vunpack.c.l.b16 %v408
        %v593 = vunpack.c.l.b16 %v409
        %v594 = vunpack.c.l.b16 %v410
        %v595 = vunpack.c.l.b16 %v411
        %v596 = vunpack.c.l.b16 %v412
        %v597 = vunpack.c.l.b16 %v413
        %v598 = vunpack.c.l.b16 %v414
        %v599 = vunpack.c.l.b16 %v415
        %v600 = vunpack.c.l.b16 %v416
        %v601 = vunpack.c.l.b16 %v417
        %v602 = vunpack.c.l.b16 %v418
        %v603 = vunpack.c.l.b16 %v419
        %v604 = vunpack.c.l.b16 %v420
        %v605 = vunpack.c.l.b16 %v421
        %v606 = vpack.c.b16 %v587, %v586
        %v607 = vpack.c.b16 %v589, %v588
        %v608 = vpack.c.b16 %v591, %v590
        %v609 = vpack.c.b16 %v593, %v592
        %v610 = vpack.c.b16 %v595, %v594
        %v611 = vpack.c.b16 %v597, %v596
        %v612 = vpack.c.b16 %v599, %v598
        %v613 = vpack.c.b16 %v601, %v600
        %v614 = vpack.c.b16 %v603, %v602
        %v615 = vpack.c.b16 %v605, %v604
        %vm626 = vcmask 261120
        %v628 = vsel %vm626, %v519, 0
        %v631 = vsel %vm626, %v521, 0
        %v634 = vsel %vm626, %v523, 0
        %v637 = vsel %vm626, %v525, 0
        %v640 = vsel %vm626, %v527, 0
        %v643 = vsel %vm626, %v529, 0
        %v646 = vsel %vm626, %v531, 0
        %v649 = vsel %vm626, %v533, 0
        %v652 = vsel %vm626, %v535, 0
        %v655 = vsel %vm626, %v537, 0
        %v658 = vsel %vm626, %v539, 0
        %v661 = vsel %vm626, %v541, 0
        %v664 = vsel %vm626, %v543, 0
        %v667 = vsel %vm626, %v545, 0
        %v670 = vsel %vm626, %v547, 0
        %v673 = vsel %vm626, %v549, 0
        %675 = vmatprep.subr.bf16.mxu0 0
        %676 = vmatpush1.bf16.msra.mxu0 %v613
        %677 = vmatprep.subr.bf16.mxu0 0
        %678 = vmatpush1.bf16.msra.mxu0 %v612
        %679 = vmatprep.subr.bf16.mxu0 0
        %680 = vmatpush1.bf16.msra.mxu0 %v611
        %681 = vmatprep.subr.bf16.mxu0 0
        %682 = vmatpush1.bf16.msra.mxu0 %v610
        %683 = vmatprep.subr.bf16.mxu0 0
        %684 = vmatpush1.bf16.msra.mxu0 %v609
        %685 = vmatprep.subr.bf16.mxu0 0
        %686 = vmatpush1.bf16.msra.mxu0 %v608
        %687 = vmatprep.subr.bf16.mxu0 0
        %688 = vmatpush1.bf16.msra.mxu0 %v607
        %689 = vmatprep.subr.bf16.mxu0 0
        %690 = vmatpush1.bf16.msra.mxu0 %v606
        %691 = vmatprep.subr.bf16.mxu0 0
        %692 = vmatpush2.bf16.msra.mxu0 0
        %693 = vmatprep.subr.bf16.mxu0 0
        %694 = vmatpush2.bf16.msra.mxu0 0
        %695 = vmatprep.subr.bf16.mxu0 0
        %696 = vmatpush2.bf16.msra.mxu0 0
        %697 = vmatprep.subr.bf16.mxu0 0
        %698 = vmatpush2.bf16.msra.mxu0 0
        %699 = vmatprep.subr.bf16.mxu0 0
        %700 = vmatpush2.bf16.msra.mxu0 0
        %701 = vmatprep.subr.bf16.mxu0 0
        %702 = vmatpush2.bf16.msra.mxu0 0
        %703 = vmatprep.subr.bf16.mxu0 0
        %704 = vmatpush2.bf16.msra.mxu0 %v615
        %705 = vmatprep.subr.bf16.mxu0 0
        %706 = vmatpush2.bf16.msra.mxu0 %v614
        %707 = vmatprep.mubr.bf16.mxu0 %v628
        %708 = vmatmul.mubr.bf16.gmra.mxu0 %v518
        %v709 = vpop.f32.mrf.mxu0
        %v710 = vadd.f32 0.0, %v709
        %v711 = vpop.f32.mrf.mxu0
        %v712 = vpop.f32.mrf.mxu0
        %v713 = vadd.f32 0.0, %v712
        %v714 = vpop.f32.mrf.mxu0
        %715 = vmatprep.mubr.bf16.mxu0 %v631
        %716 = vmatmul.mubr.bf16.gmra.mxu0 %v520
        %v717 = vpop.f32.mrf.mxu0
        %v718 = vadd.f32 0.0, %v717
        %v719 = vpop.f32.mrf.mxu0
        %v720 = vpop.f32.mrf.mxu0
        %v721 = vadd.f32 0.0, %v720
        %v722 = vpop.f32.mrf.mxu0
        %723 = vmatprep.mubr.bf16.mxu0 %v634
        %724 = vmatmul.mubr.bf16.gmra.mxu0 %v522
        %v725 = vpop.f32.mrf.mxu0
        %v726 = vadd.f32 0.0, %v725
        %v727 = vpop.f32.mrf.mxu0
        %v728 = vpop.f32.mrf.mxu0
        %v729 = vadd.f32 0.0, %v728
        %v730 = vpop.f32.mrf.mxu0
        %731 = vmatprep.mubr.bf16.mxu0 %v637
        %732 = vmatmul.mubr.bf16.gmra.mxu0 %v524
        %v733 = vpop.f32.mrf.mxu0
        %v734 = vadd.f32 0.0, %v733
        %v735 = vpop.f32.mrf.mxu0
        %v736 = vpop.f32.mrf.mxu0
        %v737 = vadd.f32 0.0, %v736
        %v738 = vpop.f32.mrf.mxu0
        %739 = vmatprep.mubr.bf16.mxu0 %v640
        %740 = vmatmul.mubr.bf16.gmra.mxu0 %v526
        %v741 = vpop.f32.mrf.mxu0
        %v742 = vadd.f32 0.0, %v741
        %v743 = vpop.f32.mrf.mxu0
        %v744 = vpop.f32.mrf.mxu0
        %v745 = vadd.f32 0.0, %v744
        %v746 = vpop.f32.mrf.mxu0
        %747 = vmatprep.mubr.bf16.mxu0 %v643
        %748 = vmatmul.mubr.bf16.gmra.mxu0 %v528
        %v749 = vpop.f32.mrf.mxu0
        %v750 = vadd.f32 0.0, %v749
        %v751 = vpop.f32.mrf.mxu0
        %v752 = vpop.f32.mrf.mxu0
        %v753 = vadd.f32 0.0, %v752
        %v754 = vpop.f32.mrf.mxu0
        %755 = vmatprep.mubr.bf16.mxu0 %v646
        %756 = vmatmul.mubr.bf16.gmra.mxu0 %v530
        %v757 = vpop.f32.mrf.mxu0
        %v758 = vadd.f32 0.0, %v757
        %v759 = vpop.f32.mrf.mxu0
        %v760 = vpop.f32.mrf.mxu0
        %v761 = vadd.f32 0.0, %v760
        %v762 = vpop.f32.mrf.mxu0
        %763 = vmatprep.mubr.bf16.mxu0 %v649
        %764 = vmatmul.mubr.bf16.gmra.mxu0 %v532
        %v765 = vpop.f32.mrf.mxu0
        %v766 = vadd.f32 0.0, %v765
        %v767 = vpop.f32.mrf.mxu0
        %v768 = vpop.f32.mrf.mxu0
        %v769 = vadd.f32 0.0, %v768
        %v770 = vpop.f32.mrf.mxu0
        %771 = vmatprep.mubr.bf16.mxu0 %v652
        %772 = vmatmul.mubr.bf16.gmra.mxu0 %v534
        %v773 = vpop.f32.mrf.mxu0
        %v774 = vadd.f32 0.0, %v773
        %v775 = vpop.f32.mrf.mxu0
        %v776 = vpop.f32.mrf.mxu0
        %v777 = vadd.f32 0.0, %v776
        %v778 = vpop.f32.mrf.mxu0
        %779 = vmatprep.mubr.bf16.mxu0 %v655
        %780 = vmatmul.mubr.bf16.gmra.mxu0 %v536
        %v781 = vpop.f32.mrf.mxu0
        %v782 = vadd.f32 0.0, %v781
        %v783 = vpop.f32.mrf.mxu0
        %v784 = vpop.f32.mrf.mxu0
        %v785 = vadd.f32 0.0, %v784
        %v786 = vpop.f32.mrf.mxu0
        %787 = vmatprep.mubr.bf16.mxu0 %v658
        %788 = vmatmul.mubr.bf16.gmra.mxu0 %v538
        %v789 = vpop.f32.mrf.mxu0
        %v790 = vadd.f32 0.0, %v789
        %v791 = vpop.f32.mrf.mxu0
        %v792 = vpop.f32.mrf.mxu0
        %v793 = vadd.f32 0.0, %v792
        %v794 = vpop.f32.mrf.mxu0
        %795 = vmatprep.mubr.bf16.mxu0 %v661
        %796 = vmatmul.mubr.bf16.gmra.mxu0 %v540
        %v797 = vpop.f32.mrf.mxu0
        %v798 = vadd.f32 0.0, %v797
        %v799 = vpop.f32.mrf.mxu0
        %v800 = vpop.f32.mrf.mxu0
        %v801 = vadd.f32 0.0, %v800
        %v802 = vpop.f32.mrf.mxu0
        %803 = vmatprep.mubr.bf16.mxu0 %v664
        %804 = vmatmul.mubr.bf16.gmra.mxu0 %v542
        %v805 = vpop.f32.mrf.mxu0
        %v806 = vadd.f32 0.0, %v805
        %v807 = vpop.f32.mrf.mxu0
        %v808 = vpop.f32.mrf.mxu0
        %v809 = vadd.f32 0.0, %v808
        %v810 = vpop.f32.mrf.mxu0
        %811 = vmatprep.mubr.bf16.mxu0 %v667
        %812 = vmatmul.mubr.bf16.gmra.mxu0 %v544
        %v813 = vpop.f32.mrf.mxu0
        %v814 = vadd.f32 0.0, %v813
        %v815 = vpop.f32.mrf.mxu0
        %v816 = vpop.f32.mrf.mxu0
        %v817 = vadd.f32 0.0, %v816
        %v818 = vpop.f32.mrf.mxu0
        %819 = vmatprep.mubr.bf16.mxu0 %v670
        %820 = vmatmul.mubr.bf16.gmra.mxu0 %v546
        %v821 = vpop.f32.mrf.mxu0
        %v822 = vadd.f32 0.0, %v821
        %v823 = vpop.f32.mrf.mxu0
        %v824 = vpop.f32.mrf.mxu0
        %v825 = vadd.f32 0.0, %v824
        %v826 = vpop.f32.mrf.mxu0
        %827 = vmatprep.mubr.bf16.mxu0 %v673
        %828 = vmatmul.mubr.bf16.gmra.mxu0 %v548
        %v829 = vpop.f32.mrf.mxu0
        %v830 = vadd.f32 0.0, %v829
        %v831 = vpop.f32.mrf.mxu0
        %v832 = vpop.f32.mrf.mxu0
        %v833 = vadd.f32 0.0, %v832
        %v834 = vpop.f32.mrf.mxu0
        %835 = vdwg.mxu0
        %v836 = vadd.f32 %v338, %v710
        %v837 = vadd.f32 %v339, %v713
        %v838 = vadd.f32 %v340, %v718
        %v839 = vadd.f32 %v341, %v721
        %v840 = vadd.f32 %v342, %v726
        %v841 = vadd.f32 %v343, %v729
        %v842 = vadd.f32 %v344, %v734
        %v843 = vadd.f32 %v345, %v737
        %v844 = vadd.f32 %v346, %v742
        %v845 = vadd.f32 %v347, %v745
        %v846 = vadd.f32 %v348, %v750
        %v847 = vadd.f32 %v349, %v753
        %v848 = vadd.f32 %v350, %v758
        %v849 = vadd.f32 %v351, %v761
        %v850 = vadd.f32 %v352, %v766
        %v851 = vadd.f32 %v353, %v769
        %v852 = vadd.f32 %v354, %v774
        %v853 = vadd.f32 %v355, %v777
        %v854 = vadd.f32 %v356, %v782
        %v855 = vadd.f32 %v357, %v785
        %v856 = vadd.f32 %v358, %v790
        %v857 = vadd.f32 %v359, %v793
        %v858 = vadd.f32 %v360, %v798
        %v859 = vadd.f32 %v361, %v801
        %v860 = vadd.f32 %v362, %v806
        %v861 = vadd.f32 %v363, %v809
        %v862 = vadd.f32 %v364, %v814
        %v863 = vadd.f32 %v365, %v817
        %v864 = vadd.f32 %v366, %v822
        %v865 = vadd.f32 %v367, %v825
        %v866 = vadd.f32 %v368, %v830
        %v867 = vadd.f32 %v369, %v833
        %vm868 = vcmask 523264
        %869 = vst.msk [vmem:[#allocation2] sm:$0xff] %vm868, %v836
        %870 = vst.msk [vmem:[#allocation2 + $0x8] sm:$0xff] %vm868, %v837
        %871 = vst.msk [vmem:[#allocation2 + $0x10] sm:$0xff] %vm868, %v838
        %872 = vst.msk [vmem:[#allocation2 + $0x18] sm:$0xff] %vm868, %v839
        %873 = vst.msk [vmem:[#allocation2 + $0x20] sm:$0xff] %vm868, %v840
        %874 = vst.msk [vmem:[#allocation2 + $0x28] sm:$0xff] %vm868, %v841
        %875 = vst.msk [vmem:[#allocation2 + $0x30] sm:$0xff] %vm868, %v842
        %876 = vst.msk [vmem:[#allocation2 + $0x38] sm:$0xff] %vm868, %v843
        %877 = vst.msk [vmem:[#allocation2 + $0x40] sm:$0xff] %vm868, %v844
        %878 = vst.msk [vmem:[#allocation2 + $0x48] sm:$0xff] %vm868, %v845
        %879 = vst.msk [vmem:[#allocation2 + $0x50] sm:$0xff] %vm868, %v846
        %880 = vst.msk [vmem:[#allocation2 + $0x58] sm:$0xff] %vm868, %v847
        %881 = vst.msk [vmem:[#allocation2 + $0x60] sm:$0xff] %vm868, %v848
        %882 = vst.msk [vmem:[#allocation2 + $0x68] sm:$0xff] %vm868, %v849
        %883 = vst.msk [vmem:[#allocation2 + $0x70] sm:$0xff] %vm868, %v850
        %884 = vst.msk [vmem:[#allocation2 + $0x78] sm:$0xff] %vm868, %v851
        %885 = vst.msk [vmem:[#allocation2 + $0x80] sm:$0xff] %vm868, %v852
        %886 = vst.msk [vmem:[#allocation2 + $0x88] sm:$0xff] %vm868, %v853
        %887 = vst.msk [vmem:[#allocation2 + $0x90] sm:$0xff] %vm868, %v854
        %888 = vst.msk [vmem:[#allocation2 + $0x98] sm:$0xff] %vm868, %v855
        %889 = vst.msk [vmem:[#allocation2 + $0xa0] sm:$0xff] %vm868, %v856
        %890 = vst.msk [vmem:[#allocation2 + $0xa8] sm:$0xff] %vm868, %v857
        %891 = vst.msk [vmem:[#allocation2 + $0xb0] sm:$0xff] %vm868, %v858
        %892 = vst.msk [vmem:[#allocation2 + $0xb8] sm:$0xff] %vm868, %v859
        %893 = vst.msk [vmem:[#allocation2 + $0xc0] sm:$0xff] %vm868, %v860
        %894 = vst.msk [vmem:[#allocation2 + $0xc8] sm:$0xff] %vm868, %v861
        %895 = vst.msk [vmem:[#allocation2 + $0xd0] sm:$0xff] %vm868, %v862
        %896 = vst.msk [vmem:[#allocation2 + $0xd8] sm:$0xff] %vm868, %v863
        %897 = vst.msk [vmem:[#allocation2 + $0xe0] sm:$0xff] %vm868, %v864
        %898 = vst.msk [vmem:[#allocation2 + $0xe8] sm:$0xff] %vm868, %v865
        %899 = vst.msk [vmem:[#allocation2 + $0xf0] sm:$0xff] %vm868, %v866
        %900 = vst.msk [vmem:[#allocation2 + $0xf8] sm:$0xff] %vm868, %v867
        // Predicated region
        $region41: #{conv2d_bn.1} parent=35 // pred_check
          %p901 = pneg %p301
        $region42: #{conv2d_bn.1} parent=35 // pred_check_branch
          %903 = sbr.rel (%p901) target = $region44
        $region43: #{conv2d_bn.1} parent=35 // pred_region
          %v904 = vld [vmem:[#allocation2] sm:$0xff]
          %v905 = vld [vmem:[#allocation2 + $0x8] sm:$0xff]
          %v906 = vld [vmem:[#allocation2 + $0x10] sm:$0xff]
          %v907 = vld [vmem:[#allocation2 + $0x18] sm:$0xff]
          %v908 = vld [vmem:[#allocation2 + $0x20] sm:$0xff]
          %v909 = vld [vmem:[#allocation2 + $0x28] sm:$0xff]
          %v910 = vld [vmem:[#allocation2 + $0x30] sm:$0xff]
          %v911 = vld [vmem:[#allocation2 + $0x38] sm:$0xff]
          %v912 = vld [vmem:[#allocation2 + $0x40] sm:$0xff]
          %v913 = vld [vmem:[#allocation2 + $0x48] sm:$0xff]
          %v914 = vld [vmem:[#allocation2 + $0x50] sm:$0xff]
          %v915 = vld [vmem:[#allocation2 + $0x58] sm:$0xff]
          %v916 = vld [vmem:[#allocation2 + $0x60] sm:$0xff]
          %v917 = vld [vmem:[#allocation2 + $0x68] sm:$0xff]
          %v918 = vld [vmem:[#allocation2 + $0x70] sm:$0xff]
          %v919 = vld [vmem:[#allocation2 + $0x78] sm:$0xff]
          %v920 = vld [vmem:[#allocation2 + $0x80] sm:$0xff]
          %v921 = vld [vmem:[#allocation2 + $0x88] sm:$0xff]
          %v922 = vld [vmem:[#allocation2 + $0x90] sm:$0xff]
          %v923 = vld [vmem:[#allocation2 + $0x98] sm:$0xff]
          %v924 = vld [vmem:[#allocation2 + $0xa0] sm:$0xff]
          %v925 = vld [vmem:[#allocation2 + $0xa8] sm:$0xff]
          %v926 = vld [vmem:[#allocation2 + $0xb0] sm:$0xff]
          %v927 = vld [vmem:[#allocation2 + $0xb8] sm:$0xff]
          %v928 = vld [vmem:[#allocation2 + $0xc0] sm:$0xff]
          %v929 = vld [vmem:[#allocation2 + $0xc8] sm:$0xff]
          %v930 = vld [vmem:[#allocation2 + $0xd0] sm:$0xff]
          %v931 = vld [vmem:[#allocation2 + $0xd8] sm:$0xff]
          %v932 = vld [vmem:[#allocation2 + $0xe0] sm:$0xff]
          %v933 = vld [vmem:[#allocation2 + $0xe8] sm:$0xff]
          %v934 = vld [vmem:[#allocation2 + $0xf0] sm:$0xff]
          %v935 = vld [vmem:[#allocation2 + $0xf8] sm:$0xff]
          %v936 = vld [vmem:[%s295] sm:$0x1]
          %v938 = vlaneseq
          %v939 = vshrl.u32 %v938, 7
          %v940 = vsub.s32 0, %v939
          %v941 = vrot.slane %v936, %v940
          %v943 = vmul.f32 %v904, %v941
          %v944 = vmul.f32 %v905, %v941
          %v945 = vmul.f32 %v906, %v941
          %v946 = vmul.f32 %v907, %v941
          %v947 = vmul.f32 %v908, %v941
          %v948 = vmul.f32 %v909, %v941
          %v949 = vmul.f32 %v910, %v941
          %v950 = vmul.f32 %v911, %v941
          %v951 = vmul.f32 %v912, %v941
          %v952 = vmul.f32 %v913, %v941
          %v953 = vmul.f32 %v914, %v941
          %v954 = vmul.f32 %v915, %v941
          %v955 = vmul.f32 %v916, %v941
          %v956 = vmul.f32 %v917, %v941
          %v957 = vmul.f32 %v918, %v941
          %v958 = vmul.f32 %v919, %v941
          %v959 = vmul.f32 %v920, %v941
          %v960 = vmul.f32 %v921, %v941
          %v961 = vmul.f32 %v922, %v941
          %v962 = vmul.f32 %v923, %v941
          %v963 = vmul.f32 %v924, %v941
          %v964 = vmul.f32 %v925, %v941
          %v965 = vmul.f32 %v926, %v941
          %v966 = vmul.f32 %v927, %v941
          %v967 = vmul.f32 %v928, %v941
          %v968 = vmul.f32 %v929, %v941
          %v969 = vmul.f32 %v930, %v941
          %v970 = vmul.f32 %v931, %v941
          %v971 = vmul.f32 %v932, %v941
          %v972 = vmul.f32 %v933, %v941
          %v973 = vmul.f32 %v934, %v941
          %v974 = vmul.f32 %v935, %v941
          %v975 = vld [vmem:[%s298] sm:$0x1]
          %v977 = vlaneseq
          %v978 = vshrl.u32 %v977, 7
          %v979 = vsub.s32 0, %v978
          %v980 = vrot.slane %v975, %v979
          %v982 = vadd.f32 %v943, %v980
          %v983 = vadd.f32 %v944, %v980
          %v984 = vadd.f32 %v945, %v980
          %v985 = vadd.f32 %v946, %v980
          %v986 = vadd.f32 %v947, %v980
          %v987 = vadd.f32 %v948, %v980
          %v988 = vadd.f32 %v949, %v980
          %v989 = vadd.f32 %v950, %v980
          %v990 = vadd.f32 %v951, %v980
          %v991 = vadd.f32 %v952, %v980
          %v992 = vadd.f32 %v953, %v980
          %v993 = vadd.f32 %v954, %v980
          %v994 = vadd.f32 %v955, %v980
          %v995 = vadd.f32 %v956, %v980
          %v996 = vadd.f32 %v957, %v980
          %v997 = vadd.f32 %v958, %v980
          %v998 = vadd.f32 %v959, %v980
          %v999 = vadd.f32 %v960, %v980
          %v1000 = vadd.f32 %v961, %v980
          %v1001 = vadd.f32 %v962, %v980
          %v1002 = vadd.f32 %v963, %v980
          %v1003 = vadd.f32 %v964, %v980
          %v1004 = vadd.f32 %v965, %v980
          %v1005 = vadd.f32 %v966, %v980
          %v1006 = vadd.f32 %v967, %v980
          %v1007 = vadd.f32 %v968, %v980
          %v1008 = vadd.f32 %v969, %v980
          %v1009 = vadd.f32 %v970, %v980
          %v1010 = vadd.f32 %v971, %v980
          %v1011 = vadd.f32 %v972, %v980
          %v1012 = vadd.f32 %v973, %v980
          %v1013 = vadd.f32 %v974, %v980
          %v1014 = vmax.f32 %v982, 0.0
          %v1015 = vmax.f32 %v983, 0.0
          %v1016 = vmax.f32 %v984, 0.0
          %v1017 = vmax.f32 %v985, 0.0
          %v1018 = vmax.f32 %v986, 0.0
          %v1019 = vmax.f32 %v987, 0.0
          %v1020 = vmax.f32 %v988, 0.0
          %v1021 = vmax.f32 %v989, 0.0
          %v1022 = vmax.f32 %v990, 0.0
          %v1023 = vmax.f32 %v991, 0.0
          %v1024 = vmax.f32 %v992, 0.0
          %v1025 = vmax.f32 %v993, 0.0
          %v1026 = vmax.f32 %v994, 0.0
          %v1027 = vmax.f32 %v995, 0.0
          %v1028 = vmax.f32 %v996, 0.0
          %v1029 = vmax.f32 %v997, 0.0
          %v1030 = vmax.f32 %v998, 0.0
          %v1031 = vmax.f32 %v999, 0.0
          %v1032 = vmax.f32 %v1000, 0.0
          %v1033 = vmax.f32 %v1001, 0.0
          %v1034 = vmax.f32 %v1002, 0.0
          %v1035 = vmax.f32 %v1003, 0.0
          %v1036 = vmax.f32 %v1004, 0.0
          %v1037 = vmax.f32 %v1005, 0.0
          %v1038 = vmax.f32 %v1006, 0.0
          %v1039 = vmax.f32 %v1007, 0.0
          %v1040 = vmax.f32 %v1008, 0.0
          %v1041 = vmax.f32 %v1009, 0.0
          %v1042 = vmax.f32 %v1010, 0.0
          %v1043 = vmax.f32 %v1011, 0.0
          %v1044 = vmax.f32 %v1012, 0.0
          %v1045 = vmax.f32 %v1013, 0.0
          %v1046 = vpack.c.bf16 %v1015, %v1014
          %v1047 = vpack.c.bf16 %v1017, %v1016
          %v1048 = vpack.c.bf16 %v1019, %v1018
          %v1049 = vpack.c.bf16 %v1021, %v1020
          %v1050 = vpack.c.bf16 %v1023, %v1022
          %v1051 = vpack.c.bf16 %v1025, %v1024
          %v1052 = vpack.c.bf16 %v1027, %v1026
          %v1053 = vpack.c.bf16 %v1029, %v1028
          %v1054 = vpack.c.bf16 %v1031, %v1030
          %v1055 = vpack.c.bf16 %v1033, %v1032
          %v1056 = vpack.c.bf16 %v1035, %v1034
          %v1057 = vpack.c.bf16 %v1037, %v1036
          %v1058 = vpack.c.bf16 %v1039, %v1038
          %v1059 = vpack.c.bf16 %v1041, %v1040
          %v1060 = vpack.c.bf16 %v1043, %v1042
          %v1061 = vpack.c.bf16 %v1045, %v1044
          %v1078 = vunpack.c.l.b16 %v1046
          %v1079 = vunpack.c.h.b16 %v1046
          %v1080 = vunpack.c.l.b16 %v1047
          %v1081 = vunpack.c.h.b16 %v1047
          %v1082 = vunpack.c.l.b16 %v1048
          %v1083 = vunpack.c.h.b16 %v1048
          %v1084 = vunpack.c.l.b16 %v1049
          %v1085 = vunpack.c.h.b16 %v1049
          %v1086 = vunpack.c.l.b16 %v1050
          %v1087 = vunpack.c.h.b16 %v1050
          %v1088 = vunpack.c.l.b16 %v1051
          %v1089 = vunpack.c.h.b16 %v1051
          %v1090 = vunpack.c.l.b16 %v1052
          %v1091 = vunpack.c.h.b16 %v1052
          %v1092 = vunpack.c.l.b16 %v1053
          %v1093 = vunpack.c.h.b16 %v1053
          %v1094 = vunpack.c.l.b16 %v1054
          %v1095 = vunpack.c.h.b16 %v1054
          %v1096 = vunpack.c.l.b16 %v1055
          %v1097 = vunpack.c.h.b16 %v1055
          %v1098 = vunpack.c.l.b16 %v1056
          %v1099 = vunpack.c.h.b16 %v1056
          %v1100 = vunpack.c.l.b16 %v1057
          %v1101 = vunpack.c.h.b16 %v1057
          %v1102 = vunpack.c.l.b16 %v1058
          %v1103 = vunpack.c.h.b16 %v1058
          %v1104 = vunpack.c.l.b16 %v1059
          %v1105 = vunpack.c.h.b16 %v1059
          %v1106 = vunpack.c.l.b16 %v1060
          %v1107 = vunpack.c.h.b16 %v1060
          %v1108 = vunpack.c.l.b16 %v1061
          %v1109 = vunpack.c.h.b16 %v1061
          %v1110 = vpack.c.b16 %v1078, %v1078
          %v1111 = vpack.c.b16 %v1079, %v1079
          %v1112 = vpack.c.b16 %v1080, %v1080
          %v1113 = vpack.c.b16 %v1081, %v1081
          %v1114 = vpack.c.b16 %v1082, %v1082
          %v1115 = vpack.c.b16 %v1083, %v1083
          %v1116 = vpack.c.b16 %v1084, %v1084
          %v1117 = vpack.c.b16 %v1085, %v1085
          %v1118 = vpack.c.b16 %v1086, %v1086
          %v1119 = vpack.c.b16 %v1087, %v1087
          %v1120 = vpack.c.b16 %v1088, %v1088
          %v1121 = vpack.c.b16 %v1089, %v1089
          %v1122 = vpack.c.b16 %v1090, %v1090
          %v1123 = vpack.c.b16 %v1091, %v1091
          %v1124 = vpack.c.b16 %v1092, %v1092
          %v1125 = vpack.c.b16 %v1093, %v1093
          %v1126 = vpack.c.b16 %v1094, %v1094
          %v1127 = vpack.c.b16 %v1095, %v1095
          %v1128 = vpack.c.b16 %v1096, %v1096
          %v1129 = vpack.c.b16 %v1097, %v1097
          %v1130 = vpack.c.b16 %v1098, %v1098
          %v1131 = vpack.c.b16 %v1099, %v1099
          %v1132 = vpack.c.b16 %v1100, %v1100
          %v1133 = vpack.c.b16 %v1101, %v1101
          %v1134 = vpack.c.b16 %v1102, %v1102
          %v1135 = vpack.c.b16 %v1103, %v1103
          %v1136 = vpack.c.b16 %v1104, %v1104
          %v1137 = vpack.c.b16 %v1105, %v1105
          %v1138 = vpack.c.b16 %v1106, %v1106
          %v1139 = vpack.c.b16 %v1107, %v1107
          %v1140 = vpack.c.b16 %v1108, %v1108
          %v1141 = vpack.c.b16 %v1109, %v1109
          %vm1174 = vcmask 519168
          %1175 = vst.msk [vmem:[%s271] sm:$0xf] %vm1174, %v1110
          %1176 = vst.msk [vmem:[%s271 + $0x4] sm:$0xf] %vm1174, %v1111
          %1177 = vst.msk [vmem:[%s271 + $0x8] sm:$0xf] %vm1174, %v1112
          %1178 = vst.msk [vmem:[%s271 + $0xc] sm:$0xf] %vm1174, %v1113
          %1179 = vst.msk [vmem:[%s271 + $0x10] sm:$0xf] %vm1174, %v1114
          %1180 = vst.msk [vmem:[%s271 + $0x14] sm:$0xf] %vm1174, %v1115
          %1181 = vst.msk [vmem:[%s271 + $0x18] sm:$0xf] %vm1174, %v1116
          %1182 = vst.msk [vmem:[%s271 + $0x1c] sm:$0xf] %vm1174, %v1117
          %1183 = vst.msk [vmem:[%s271 + $0x20] sm:$0xf] %vm1174, %v1118
          %1184 = vst.msk [vmem:[%s271 + $0x24] sm:$0xf] %vm1174, %v1119
          %1185 = vst.msk [vmem:[%s271 + $0x28] sm:$0xf] %vm1174, %v1120
          %1186 = vst.msk [vmem:[%s271 + $0x2c] sm:$0xf] %vm1174, %v1121
          %1187 = vst.msk [vmem:[%s271 + $0x30] sm:$0xf] %vm1174, %v1122
          %1188 = vst.msk [vmem:[%s271 + $0x34] sm:$0xf] %vm1174, %v1123
          %1189 = vst.msk [vmem:[%s271 + $0x38] sm:$0xf] %vm1174, %v1124
          %1190 = vst.msk [vmem:[%s271 + $0x3c] sm:$0xf] %vm1174, %v1125
          %1191 = vst.msk [vmem:[%s271 + $0x40] sm:$0xf] %vm1174, %v1126
          %1192 = vst.msk [vmem:[%s271 + $0x44] sm:$0xf] %vm1174, %v1127
          %1193 = vst.msk [vmem:[%s271 + $0x48] sm:$0xf] %vm1174, %v1128
          %1194 = vst.msk [vmem:[%s271 + $0x4c] sm:$0xf] %vm1174, %v1129
          %1195 = vst.msk [vmem:[%s271 + $0x50] sm:$0xf] %vm1174, %v1130
          %1196 = vst.msk [vmem:[%s271 + $0x54] sm:$0xf] %vm1174, %v1131
          %1197 = vst.msk [vmem:[%s271 + $0x58] sm:$0xf] %vm1174, %v1132
          %1198 = vst.msk [vmem:[%s271 + $0x5c] sm:$0xf] %vm1174, %v1133
          %1199 = vst.msk [vmem:[%s271 + $0x60] sm:$0xf] %vm1174, %v1134
          %1200 = vst.msk [vmem:[%s271 + $0x64] sm:$0xf] %vm1174, %v1135
          %1201 = vst.msk [vmem:[%s271 + $0x68] sm:$0xf] %vm1174, %v1136
          %1202 = vst.msk [vmem:[%s271 + $0x6c] sm:$0xf] %vm1174, %v1137
          %1203 = vst.msk [vmem:[%s271 + $0x70] sm:$0xf] %vm1174, %v1138
          %1204 = vst.msk [vmem:[%s271 + $0x74] sm:$0xf] %vm1174, %v1139
          %1205 = vst.msk [vmem:[%s271 + $0x78] sm:$0xf] %vm1174, %v1140
          %1206 = vst.msk [vmem:[%s271 + $0x7c] sm:$0xf] %vm1174, %v1141
        $region44: #{conv2d_bn.1} parent=35 // pred_fallthru
          _
        %s1207 = sand.u32 %s155, 1
        %s1208 = scalar_lea.sflag [#allocation4], %s1207
        %s1209 = sand.u32 %s155, 1
        %s1210 = smul.addr %s1209, 128
        %s1211 = scalar_lea.vmem [#allocation3], %s1210
        // Predicated region
        $region45: #{conv2d_bn.1} parent=35 // pred_check
          %p1212 = pneg %p165
        $region46: #{conv2d_bn.1} parent=35 // pred_check_branch
          %1214 = sbr.rel (%p1212) target = $region48
        $region47: #{conv2d_bn.1} parent=35 // pred_region
          %s1215 = smul.u32 32, %s23
          %s1217 = ssub.s32 2048, 2048
          %1218 = vsyncadd %s1208, %s1217
          %s1219 = sadd.s32 %s24, %s1215
          %s1220 = smul.addr %s1219, 64
          %s1221 = scalar_lea.hbm %s4, %s1220
          %s1222 = sshll.u32 %s1211, 4
          %s1223 = int_to_ptr.vmem [resolvable:$true] %s1222
          %1228 = dma.vmem_to_hbm [thread:$0]  %s1223, 2048, %s1221, %s1208, 64, 64, 4
        $region48: #{conv2d_bn.1} parent=35 // pred_fallthru
          _
      $region36: #{conv2d_bn.1} parent=5 // pred_fallthru
        _
      %p1229 = scmp.le.s32.totalorder 2, %s13
      // Predicated region
      $region49: #{conv2d_bn.1} parent=5 // pred_check
        %p1230 = pneg %p1229
      $region50: #{conv2d_bn.1} parent=5 // pred_check_branch
        %1232 = sbr.rel (%p1230) target = $region52
      $region51: #{conv2d_bn.1} parent=5 // pred_region
        %s1233 = ssub.s32 %s13, 2
        // Predicated region
        $region53: #{conv2d_bn.1} parent=51 // pred_check
          %p1234 = pneg %p171
        $region54: #{conv2d_bn.1} parent=51 // pred_check_branch
          %1236 = sbr.rel (%p1234) target = $region56
        $region55: #{conv2d_bn.1} parent=51 // pred_region
          %s1237 = sand.u32 %s156, 1
          %s1238 = scalar_lea.sflag [#allocation4], %s1237
          %s1239 = sand.u32 %s156, 1
          %s1240 = smul.addr %s1239, 128
          %s1241 = scalar_lea.vmem [#allocation3], %s1240
          %1242 = dma.done %s1238, 2048
        $region56: #{conv2d_bn.1} parent=51 // pred_fallthru
          _
      $region52: #{conv2d_bn.1} parent=5 // pred_fallthru
        _
    $region6: #{conv2d_bn.1} parent=1 // loop_footer
      %s17 = sadd.s32 1, %s13
    $region7: #{conv2d_bn.1} parent=1 // loop_footer_branch
      %12 = sbr.rel target = $region3
    $region8: #{conv2d_bn.1} parent=1 // loop_exit
      _
    %1243 = vsyncpa [#allocation4], 1
    %s1244 = scalar_lea.sflag [#allocation4], 1
    %1245 = vsyncpa %s1244, 1

</llo_original>
